<compile_context>
chip_gen: v7x
topology: tpu7x:2x2x1
jax: 0.10.0
libtpu: 0.0.40
codegen_flags: <defaults>
</compile_context>

<pallas_src>
import functools

import jax
import jax.numpy as jnp
from jax import lax
from jax.experimental import pallas as pl
from jax.experimental.pallas import tpu as pltpu


def _focal_loss_kernel(logits_ref, targets_ref, out_ref, *,
                       alpha, gamma, hw, r_tile, need_mask):
    t = pl.program_id(1)

    logits = logits_ref[0].astype(jnp.float32)      # (C, r_tile, 128)
    tgt = targets_ref[0, 0]                         # (r_tile, 128) int32
    C = logits.shape[0]

    # --- numerically stable softmax pieces over the class axis (axis 0) ---
    # Leading-axis reductions are vreg-wise VPU ops (no XLU).
    m = jnp.max(logits, axis=0)                     # (r_tile, 128)
    shifted = logits - m[None]                      # (C, r_tile, 128)
    e = jnp.exp(shifted)                            # single EUP exp pass
    sumexp = jnp.sum(e, axis=0)                     # (r_tile, 128)

    # --- gather the target class with a one-hot select (pure VPU) ---
    cls = lax.broadcasted_iota(jnp.int32, logits.shape, 0)
    onehot = cls == tgt[None]
    tgt_shift = jnp.sum(jnp.where(onehot, shifted, 0.0), axis=0)  # tgt_logit - m
    exp_tgt = jnp.sum(jnp.where(onehot, e, 0.0), axis=0)          # exp(tgt_logit - m)

    # --- focal loss per pixel (no second full-width exp) ---
    ce = jnp.maximum(jnp.log(sumexp) - tgt_shift, 0.0)            # = -log p_t
    pt = exp_tgt * pl.reciprocal(sumexp, approx=False)            # softmax prob
    one_minus_pt = jnp.maximum(1.0 - pt, 0.0)

    g = float(gamma)
    if g.is_integer() and 0.0 <= g <= 8.0:
        gi = int(g)
        if gi == 0:
            mod = jnp.ones_like(one_minus_pt)
        else:
            mod = one_minus_pt
            for _ in range(gi - 1):                 # cheap VPU multiplies
                mod = mod * one_minus_pt
    else:
        mod = jnp.power(one_minus_pt, jnp.float32(gamma))  # EUP log+exp fallback

    focal = jnp.float32(alpha) * mod * ce           # (r_tile, 128)

    # --- discard lane-pad / Pallas edge-block pixels (static guard) ---
    if need_mask:
        row = lax.broadcasted_iota(jnp.int32, focal.shape, 0)
        lane = lax.broadcasted_iota(jnp.int32, focal.shape, 1)
        pix = (t * r_tile + row) * 128 + lane
        focal = jnp.where(pix < hw, focal, 0.0)     # keep a select (NaN-safe)

    # --- dense partial sum: reduce row groups with vreg-wise adds ---
    if r_tile > 8 and r_tile % 8 == 0:
        partial = focal.reshape(r_tile // 8, 8, 128).sum(axis=0)  # (8, 128)
    else:
        partial = focal                                           # (r_tile, 128)

    # Accumulate directly in the per-batch output block (resident across t).
    @pl.when(t == 0)
    def _init():
        out_ref[0] = partial

    @pl.when(t != 0)
    def _accum():
        out_ref[0] = out_ref[0] + partial


def focal_loss(inputs, targets, alpha=0.25, gamma=2,
               target_block_bytes=3 * 1024 * 1024):
    """inputs: (N, C, H, W) float logits (f32 or bf16);
    targets: (N, H, W) integer class indices."""
    N, C, H, W = inputs.shape
    HW = H * W
    itemsize = jnp.dtype(inputs.dtype).itemsize

    if targets.dtype != jnp.int32:
        targets = targets.astype(jnp.int32)

    logits = inputs.reshape(N, C, HW)
    tgt = targets.reshape(N, 1, HW)

    # Lane-pad pixels to a multiple of 128 so the (rows, 128) view is free.
    hw_pad = pl.cdiv(HW, 128) * 128
    if hw_pad != HW:
        # TODO(synk): this pad is one extra HBM copy; typical segmentation
        # shapes (H*W % 128 == 0) take the copy-free path.
        pad = hw_pad - HW
        logits = jnp.pad(logits, ((0, 0), (0, 0), (0, pad)))
        tgt = jnp.pad(tgt, ((0, 0), (0, 0), (0, pad)))
    R = hw_pad // 128
    logits = logits.reshape(N, C, R, 128)
    tgt = tgt.reshape(N, 1, R, 128)

    # Rows per grid step: ~target_block_bytes of logits, sublane-aligned
    # (8 rows for 4-byte, 16 for 2-byte dtypes).  Fits default scoped VMEM
    # double-buffered on v5e/v6e/v7x.
    sub = {4: 8, 2: 16, 1: 32}.get(itemsize, 8)
    rows_budget = max(sub, (target_block_bytes // (C * 128 * itemsize)) // sub * sub)
    if R <= rows_budget:
        r_tile, num_t = R, 1
    else:
        r_tile, num_t = rows_budget, pl.cdiv(R, rows_budget)

    acc_rows = 8 if (r_tile % 8 == 0 and r_tile > 8) else r_tile
    need_mask = (num_t * r_tile * 128) != HW

    kernel = functools.partial(
        _focal_loss_kernel, alpha=float(alpha), gamma=gamma,
        hw=HW, r_tile=r_tile, need_mask=need_mask)

    cost = pl.CostEstimate(
        flops=(C + 10) * N * HW,
        transcendentals=(C + 3) * N * HW,
        bytes_accessed=N * C * HW * itemsize + N * HW * 4,
    )

    partials = pl.pallas_call(
        kernel,
        out_shape=jax.ShapeDtypeStruct((N, acc_rows, 128), jnp.float32),
        grid_spec=pltpu.PrefetchScalarGridSpec(
            num_scalar_prefetch=0,
            grid=(N, num_t),
            in_specs=[
                pl.BlockSpec((1, C, r_tile, 128), lambda n, t: (n, 0, t, 0)),
                pl.BlockSpec((1, 1, r_tile, 128), lambda n, t: (n, 0, t, 0)),
            ],
            out_specs=pl.BlockSpec((1, acc_rows, 128), lambda n, t: (n, 0, 0)),
        ),
        compiler_params=pltpu.CompilerParams(
            # Per-batch partial outputs are independent -> N can be sharded
            # across v7x's two TensorCores; row-tile axis accumulates.
            dimension_semantics=("parallel", "arbitrary")),
        cost_estimate=cost,
    )(logits, tgt)

    # Tiny epilogue in plain JAX: sum the dense per-batch partials and mean.
    return jnp.sum(partials) / jnp.float32(N * HW)


def focal_loss_ref(inputs, targets, alpha=0.25, gamma=2):
    """Pure-JAX reference matching F.cross_entropy + focal modulation."""
    N, C, H, W = inputs.shape
    logits = jnp.transpose(inputs, (0, 2, 3, 1)).reshape(-1, C).astype(jnp.float32)
    tgt = targets.reshape(-1)
    logp = jax.nn.log_softmax(logits, axis=-1)
    ce = -jnp.take_along_axis(logp, tgt[:, None], axis=-1)[:, 0]
    pt = jnp.exp(-ce)
    focal = alpha * (1.0 - pt) ** gamma * ce
    return jnp.mean(focal)


if __name__ == "__main__":
    key = jax.random.PRNGKey(0)
    ks = jax.random.split(key, 6)

    # Test 1: aligned small shape (HW % 128 == 0, single row tile, no mask).
    N, C, H, W = 2, 4, 16, 16
    x = jax.random.normal(ks[0], (N, C, H, W), dtype=jnp.float32)
    y = jax.random.randint(ks[1], (N, H, W), 0, C, dtype=jnp.int32)
    out = jax.block_until_ready(focal_loss(x, y, alpha=0.25, gamma=2))
    ref = focal_loss_ref(x, y, alpha=0.25, gamma=2)
    assert jnp.allclose(out, ref, rtol=1e-5, atol=1e-6), (out, ref)

    # Test 2: ragged HW (225 pixels) -> lane pad + in-kernel pixel mask.
    N2, C2, H2, W2 = 2, 5, 15, 15
    x2 = jax.random.normal(ks[2], (N2, C2, H2, W2), dtype=jnp.float32)
    y2 = jax.random.randint(ks[3], (N2, H2, W2), 0, C2, dtype=jnp.int32)
    out2 = jax.block_until_ready(focal_loss(x2, y2, alpha=0.25, gamma=2))
    ref2 = focal_loss_ref(x2, y2, alpha=0.25, gamma=2)
    assert jnp.allclose(out2, ref2, rtol=1e-5, atol=1e-6), (out2, ref2)

    # Test 3: multi row-tile accumulation + ragged edge block + gamma=3
    # (tiny block budget to force num_t > 1).
    N3, C3, H3, W3 = 2, 4, 48, 48
    x3 = jax.random.normal(ks[4], (N3, C3, H3, W3), dtype=jnp.float32)
    y3 = jax.random.randint(ks[5], (N3, H3, W3), 0, C3, dtype=jnp.int32)
    out3 = jax.block_until_ready(
        focal_loss(x3, y3, alpha=0.25, gamma=3, target_block_bytes=16 * 1024))
    ref3 = focal_loss_ref(x3, y3, alpha=0.25, gamma=3)
    assert jnp.allclose(out3, ref3, rtol=1e-5, atol=1e-6), (out3, ref3)

    print("KERNEL_OK")
</pallas_src>

<mosaic_0001>
module attributes {stable_mosaic.version = 11 : i64} {
  func.func @_focal_loss_kernel(%arg0: i32, %arg1: i32, %arg2: memref<1x4x2x128xf32, #tpu.memory_space<vmem>>, %arg3: memref<1x1x2x128xi32, #tpu.memory_space<vmem>>, %arg4: memref<1x2x128xf32, #tpu.memory_space<vmem>>) attributes {dimension_semantics = [#tpu.dimension_semantics<parallel>, #tpu.dimension_semantics<arbitrary>], iteration_bounds = array<i64: 2, 1>, scalar_prefetch = 0 : i64, scratch_operands = 0 : i64, tpu.core_type = #tpu.core_type<tc>, window_params = [{transform_indices = @transform_0, window_bounds = array<i64: 1, 4, 2, 128>}, {transform_indices = @transform_1, window_bounds = array<i64: 1, 1, 2, 128>}, {transform_indices = @transform_2, window_bounds = array<i64: 1, 2, 128>}]} {
    %c0 = arith.constant 0 : index
    %c0_0 = arith.constant 0 : index
    %c0_1 = arith.constant 0 : index
    %c0_2 = arith.constant 0 : index
    %0 = vector.load %arg2[%c0, %c0_0, %c0_1, %c0_2] : memref<1x4x2x128xf32, #tpu.memory_space<vmem>>, vector<1x4x2x128xf32>
    %1 = vector.shape_cast %0 : vector<1x4x2x128xf32> to vector<4x2x128xf32>
    %c0_3 = arith.constant 0 : index
    %c0_4 = arith.constant 0 : index
    %c0_5 = arith.constant 0 : index
    %c0_6 = arith.constant 0 : index
    %2 = vector.load %arg3[%c0_3, %c0_4, %c0_5, %c0_6] : memref<1x1x2x128xi32, #tpu.memory_space<vmem>>, vector<1x1x2x128xi32>
    %3 = vector.shape_cast %2 : vector<1x1x2x128xi32> to vector<2x128xi32>
    %cst = arith.constant dense<0xFF800000> : vector<2x128xf32>
    %4 = vector.multi_reduction <maximumf>, %1, %cst [0] : vector<4x2x128xf32> to vector<2x128xf32>
    %5 = vector.shape_cast %4 : vector<2x128xf32> to vector<1x2x128xf32>
    %6 = vector.broadcast %5 : vector<1x2x128xf32> to vector<4x2x128xf32>
    %7 = arith.subf %1, %6 : vector<4x2x128xf32>
    %8 = math.exp %7 : vector<4x2x128xf32>
    %cst_7 = arith.constant dense<0.000000e+00> : vector<2x128xf32>
    %9 = vector.multi_reduction <add>, %8, %cst_7 [0] : vector<4x2x128xf32> to vector<2x128xf32>
    %10 = tpu.iota {dimensions = array<i32: 0>} : vector<4x2x128xi32>
    %11 = vector.shape_cast %3 : vector<2x128xi32> to vector<1x2x128xi32>
    %12 = vector.broadcast %11 : vector<1x2x128xi32> to vector<4x2x128xi32>
    %13 = arith.cmpi eq, %10, %12 : vector<4x2x128xi32>
    %cst_8 = arith.constant 0.000000e+00 : f32
    %14 = vector.broadcast %cst_8 : f32 to vector<4x2x128xf32>
    %15 = arith.select %13, %7, %14 : vector<4x2x128xi1>, vector<4x2x128xf32>
    %cst_9 = arith.constant dense<0.000000e+00> : vector<2x128xf32>
    %16 = vector.multi_reduction <add>, %15, %cst_9 [0] : vector<4x2x128xf32> to vector<2x128xf32>
    %cst_10 = arith.constant 0.000000e+00 : f32
    %17 = vector.broadcast %cst_10 : f32 to vector<4x2x128xf32>
    %18 = arith.select %13, %8, %17 : vector<4x2x128xi1>, vector<4x2x128xf32>
    %cst_11 = arith.constant dense<0.000000e+00> : vector<2x128xf32>
    %19 = vector.multi_reduction <add>, %18, %cst_11 [0] : vector<4x2x128xf32> to vector<2x128xf32>
    %20 = math.log %9 : vector<2x128xf32>
    %21 = arith.subf %20, %16 : vector<2x128xf32>
    %cst_12 = arith.constant 0.000000e+00 : f32
    %22 = vector.broadcast %cst_12 : f32 to vector<2x128xf32>
    %23 = arith.maximumf %21, %22 : vector<2x128xf32>
    %24 = tpu.reciprocal %9 : vector<2x128xf32> -> vector<2x128xf32>
    %25 = arith.mulf %19, %24 : vector<2x128xf32>
    %cst_13 = arith.constant 1.000000e+00 : f32
    %26 = vector.broadcast %cst_13 : f32 to vector<2x128xf32>
    %27 = arith.subf %26, %25 : vector<2x128xf32>
    %cst_14 = arith.constant 0.000000e+00 : f32
    %28 = vector.broadcast %cst_14 : f32 to vector<2x128xf32>
    %29 = arith.maximumf %27, %28 : vector<2x128xf32>
    %30 = arith.mulf %29, %29 : vector<2x128xf32>
    %cst_15 = arith.constant 2.500000e-01 : f32
    %31 = vector.broadcast %cst_15 : f32 to vector<2x128xf32>
    %32 = arith.mulf %31, %30 : vector<2x128xf32>
    %33 = arith.mulf %32, %23 : vector<2x128xf32>
    %c0_i32 = arith.constant 0 : i32
    %34 = arith.cmpi eq, %arg1, %c0_i32 : i32
    %35 = arith.extui %34 : i1 to i32
    %c0_i32_16 = arith.constant 0 : i32
    %36 = arith.cmpi ne, %35, %c0_i32_16 : i32
    scf.if %36 {
      %c0_19 = arith.constant 0 : index
      %c0_20 = arith.constant 0 : index
      %c0_21 = arith.constant 0 : index
      %40 = vector.load %arg4[%c0_19, %c0_20, %c0_21] : memref<1x2x128xf32, #tpu.memory_space<vmem>>, vector<1x2x128xf32>
      %41 = vector.shape_cast %40 : vector<1x2x128xf32> to vector<2x128xf32>
      %42 = vector.shape_cast %33 : vector<2x128xf32> to vector<1x2x128xf32>
      tpu.vector_store %arg4[%c0_19, %c0_20, %c0_21], %42 {strides = array<i32>} : memref<1x2x128xf32, #tpu.memory_space<vmem>>, vector<1x2x128xf32>,
    } else {
    }
    %c0_i32_17 = arith.constant 0 : i32
    %37 = arith.cmpi ne, %arg1, %c0_i32_17 : i32
    %38 = arith.extui %37 : i1 to i32
    %c0_i32_18 = arith.constant 0 : i32
    %39 = arith.cmpi ne, %38, %c0_i32_18 : i32
    scf.if %39 {
      %c0_19 = arith.constant 0 : index
      %c0_20 = arith.constant 0 : index
      %c0_21 = arith.constant 0 : index
      %40 = vector.load %arg4[%c0_19, %c0_20, %c0_21] : memref<1x2x128xf32, #tpu.memory_space<vmem>>, vector<1x2x128xf32>
      %41 = vector.shape_cast %40 : vector<1x2x128xf32> to vector<2x128xf32>
      %42 = arith.addf %41, %33 : vector<2x128xf32>
      %c0_22 = arith.constant 0 : index
      %c0_23 = arith.constant 0 : index
      %c0_24 = arith.constant 0 : index
      %43 = vector.load %arg4[%c0_22, %c0_23, %c0_24] : memref<1x2x128xf32, #tpu.memory_space<vmem>>, vector<1x2x128xf32>
      %44 = vector.shape_cast %43 : vector<1x2x128xf32> to vector<2x128xf32>
      %45 = vector.shape_cast %42 : vector<2x128xf32> to vector<1x2x128xf32>
      tpu.vector_store %arg4[%c0_22, %c0_23, %c0_24], %45 {strides = array<i32>} : memref<1x2x128xf32, #tpu.memory_space<vmem>>, vector<1x2x128xf32>,
    } else {
    }
    return
  }
  func.func @transform_0(%arg0: i32, %arg1: i32) -> (i32, i32, i32, i32) {
    %c0_i32 = arith.constant 0 : i32
    %c0_i32_0 = arith.constant 0 : i32
    %c0_i32_1 = arith.constant 0 : i32
    return %arg0, %c0_i32, %arg1, %c0_i32_0 : i32, i32, i32, i32
  }
  func.func @transform_1(%arg0: i32, %arg1: i32) -> (i32, i32, i32, i32) {
    %c0_i32 = arith.constant 0 : i32
    %c0_i32_0 = arith.constant 0 : i32
    %c0_i32_1 = arith.constant 0 : i32
    return %arg0, %c0_i32, %arg1, %c0_i32_0 : i32, i32, i32, i32
  }
  func.func @transform_2(%arg0: i32, %arg1: i32) -> (i32, i32, i32) {
    %c0_i32 = arith.constant 0 : i32
    %c0_i32_0 = arith.constant 0 : i32
    %c0_i32_1 = arith.constant 0 : i32
    return %arg0, %c0_i32, %c0_i32_0 : i32, i32, i32
  }
}

</mosaic_0001>

<llo_original>
// kernel: tpu_custom_call.1
$region0: #{tpu_custom_call.1}
  #allocation0 [shape = 'u32[]', space=smem, size = 0x4, offset = 0x4, fixed_abs, tag = 'smem constant byte address 0x4 - core index']
  #allocation1 [shape = 'u32[144,128]{1,0:T(1,128)}', space=vmem, size = 0x12000, scoped, tag = 'internal scratch']
  %s0 = inlined_call_operand.hbm [shape: f32[2,4,2,128], index: 0, kind: input, shape index: {}]
  %s1 = inlined_call_operand.hbm [shape: s32[2,1,2,128], index: 1, kind: input, shape index: {}]
  %s2 = inlined_call_operand.hbm [shape: f32[2,2,128], index: 2, kind: output, shape index: {}]
  %s3 = sld [smem:[#allocation0]]
  $region57: #{tpu_custom_call.1} parent=0
    _
  %s5 = ssub.s32 1, %s3
  %s6 = scalar_select 0, %s5, %s3
  $region1: #{tpu_custom_call.1} parent=0
    #allocation2 [shape = 'u8[8192]{0}', space=vmem, size = 0x2000, scoped, tag = 'input window, operand 0']
    #allocation3 [shape = 's32[2]{0}', space=sflag, size = 0x8, scoped, tag = 'scoped memory for tpu_custom_call.1']
    #allocation4 [shape = 's32[2]{0}', space=sflag, size = 0x8, scoped, tag = 'scoped memory for tpu_custom_call.1']
    #allocation5 [shape = 'u8[2048]{0}', space=vmem, size = 0x800, scoped, tag = 'input window, operand 1']
    #allocation6 [shape = 's32[2]{0}', space=sflag, size = 0x8, scoped, tag = 'scoped memory for tpu_custom_call.1']
    #allocation7 [shape = 'u8[2048]{0}', space=vmem, size = 0x800, scoped, tag = 'output window, operand 0']
    %7 = vsyncpa [#allocation3], 0
    %s8 = scalar_lea.sflag [#allocation3], 1
    %9 = vsyncpa %s8, 0
    %10 = vsyncpa [#allocation6], 0
    %s11 = scalar_lea.sflag [#allocation6], 1
    %12 = vsyncpa %s11, 0
    %13 = vsyncpa [#allocation4], 0
    %s14 = scalar_lea.sflag [#allocation4], 1
    %15 = vsyncpa %s14, 0
    loop: start=0, step=1, limit=4
    $region2: #{tpu_custom_call.1} parent=1 // loop_pre_header
      _
    $region3: #{tpu_custom_call.1} parent=1 // loop_header
      %s17 = sphi 0, %s21
      %p18 = scmp.ge.s32.totalorder %s17, 4
      %s24 = sphi 0, %s36
      %s25 = sphi 0, %s32
      %s26 = sphi 0, %s24
      %s27 = sphi 0, %s25
      %s28 = sphi 0, %s26
      %s29 = sphi 0, %s27
      %s41 = sphi 0, %s43
      %s44 = sphi 0, %s41
      %s45 = sphi 0, %s44
      %s61 = sphi 0, %s45
      %s69 = sphi 0, %s71
      %s72 = sphi 0, %s69
      %s73 = sphi 0, %s72
      %s89 = sphi 0, %s73
      %s95 = sphi 0, %s97
      %s98 = sphi 0, %s95
      %s99 = sphi 0, %s98
      %s115 = sphi 0, %s99
    $region4: #{tpu_custom_call.1} parent=1 // loop_header_branch
      %20 = sbr.rel (%p18) target = $region8
    $region5: #{tpu_custom_call.1} parent=1 // loop_body
      %s22 = ssub.s32 %s17, 1
      %s23 = ssub.s32 %s17, 2
      %s30 = sadd.s32 1, %s25
      %p31 = scmp.ge.s32.totalorder %s30, 1
      %s32 = scalar_select %p31, 0, %s30
      %s33 = sadd.s32 1, %s24
      %s34 = scalar_select %p31, %s33, %s24
      %p35 = scmp.ge.s32.totalorder %s34, 2
      %s36 = scalar_select %p35, 0, %s34
      %s37 = ssub.s32 %s24, %s36
      %s38 = ssub.s32 %s25, %s32
      %s39 = sor.u32 %s37, %s38
      %p40 = scmp.eq.s32.totalorder %s39, 0
      %s42 = sadd.s32 %s41, 1
      %s43 = scalar_select %p40, %s41, %s42
      %p46 = pneg %p40
      %p47 = scmp.eq.s32.totalorder %s17, 1
      %p48 = por %p46, %p47
      %p49 = scmp.ne.s32.totalorder %s41, %s44
      %p50 = scmp.eq.s32.totalorder %s17, 0
      %p51 = por %p49, %p50
      %p52 = scmp.ne.s32.totalorder %s41, %s44
      %p53 = scmp.eq.s32.totalorder %s22, 1
      %p54 = por %p52, %p53
      %p55 = scmp.ne.s32.totalorder %s44, %s45
      %p56 = scmp.eq.s32.totalorder %s22, 0
      %p57 = por %p55, %p56
      %p58 = scmp.ne.s32.totalorder %s44, %s45
      %p59 = scmp.eq.s32.totalorder %s23, 1
      %p60 = por %p58, %p59
      %p62 = scmp.ne.s32.totalorder %s45, %s61
      %p63 = scmp.eq.s32.totalorder %s23, 0
      %p64 = por %p62, %p63
      %s65 = ssub.s32 %s24, %s36
      %s66 = ssub.s32 %s25, %s32
      %s67 = sor.u32 %s65, %s66
      %p68 = scmp.eq.s32.totalorder %s67, 0
      %s70 = sadd.s32 %s69, 1
      %s71 = scalar_select %p68, %s69, %s70
      %p74 = pneg %p68
      %p75 = scmp.eq.s32.totalorder %s17, 1
      %p76 = por %p74, %p75
      %p77 = scmp.ne.s32.totalorder %s69, %s72
      %p78 = scmp.eq.s32.totalorder %s17, 0
      %p79 = por %p77, %p78
      %p80 = scmp.ne.s32.totalorder %s69, %s72
      %p81 = scmp.eq.s32.totalorder %s22, 1
      %p82 = por %p80, %p81
      %p83 = scmp.ne.s32.totalorder %s72, %s73
      %p84 = scmp.eq.s32.totalorder %s22, 0
      %p85 = por %p83, %p84
      %p86 = scmp.ne.s32.totalorder %s72, %s73
      %p87 = scmp.eq.s32.totalorder %s23, 1
      %p88 = por %p86, %p87
      %p90 = scmp.ne.s32.totalorder %s73, %s89
      %p91 = scmp.eq.s32.totalorder %s23, 0
      %p92 = por %p90, %p91
      %s93 = ssub.s32 %s24, %s36
      %p94 = scmp.eq.s32.totalorder %s93, 0
      %s96 = sadd.s32 %s95, 1
      %s97 = scalar_select %p94, %s95, %s96
      %p100 = pneg %p94
      %p101 = scmp.eq.s32.totalorder %s17, 1
      %p102 = por %p100, %p101
      %p103 = scmp.ne.s32.totalorder %s95, %s98
      %p104 = scmp.eq.s32.totalorder %s17, 0
      %p105 = por %p103, %p104
      %p106 = scmp.ne.s32.totalorder %s95, %s98
      %p107 = scmp.eq.s32.totalorder %s22, 1
      %p108 = por %p106, %p107
      %p109 = scmp.ne.s32.totalorder %s98, %s99
      %p110 = scmp.eq.s32.totalorder %s22, 0
      %p111 = por %p109, %p110
      %p112 = scmp.ne.s32.totalorder %s98, %s99
      %p113 = scmp.eq.s32.totalorder %s23, 1
      %p114 = por %p112, %p113
      %p116 = scmp.ne.s32.totalorder %s99, %s115
      %p117 = scmp.eq.s32.totalorder %s23, 0
      %p118 = por %p116, %p117
      %p119 = scmp.le.s32.totalorder 1, %s17
      %p120 = scmp.lt.s32.totalorder %s17, 3
      %p121 = pnand %p119, %p120
      %p122 = pneg %p121
      // Predicated region
      $region9: #{tpu_custom_call.1} parent=5 // pred_check
        _
      $region10: #{tpu_custom_call.1} parent=5 // pred_check_branch
        %124 = sbr.rel (%p121) target = $region12
      $region11: #{tpu_custom_call.1} parent=5 // pred_region
        %s125 = ssub.s32 %s17, 1
      $region12: #{tpu_custom_call.1} parent=5 // pred_fallthru
        _
      %p126 = scmp.lt.s32.totalorder %s17, 2
      // Predicated region
      $region13: #{tpu_custom_call.1} parent=5 // pred_check
        %p127 = pneg %p126
      $region14: #{tpu_custom_call.1} parent=5 // pred_check_branch
        %129 = sbr.rel (%p127) target = $region16
      $region15: #{tpu_custom_call.1} parent=5 // pred_region
        // Predicated region
        $region17: #{tpu_custom_call.1} parent=15 // pred_check
          %p130 = pneg %p51
        $region18: #{tpu_custom_call.1} parent=15 // pred_check_branch
          %132 = sbr.rel (%p130) target = $region20
        $region19: #{tpu_custom_call.1} parent=15 // pred_region
          %s133 = sand.u32 %s41, 1
          %s134 = scalar_lea.sflag [#allocation3], %s133
          %s135 = sand.u32 %s41, 1
          %s136 = smul.addr %s135, 8
          %s137 = scalar_lea.vmem [#allocation2], %s136
          %s139 = ssub.s32 128, 128
          %140 = vsyncadd %s134, %s139
          %s141 = smul.addr %s24, 4
          %s142 = sadd.s32 %s25, %s141
          %s143 = smul.addr %s142, 32
          %s144 = scalar_lea.hbm %s0, %s143
          %s145 = sshll.u32 %s137, 4
          %s146 = int_to_ptr.vmem [resolvable:$true] %s145
          %151 = dma.hbm_to_vmem [thread:$0]  %s144, 128, %s146, %s134, 32, 32, 2
        $region20: #{tpu_custom_call.1} parent=15 // pred_fallthru
          _
        // Predicated region
        $region21: #{tpu_custom_call.1} parent=15 // pred_check
          %p152 = pneg %p79
        $region22: #{tpu_custom_call.1} parent=15 // pred_check_branch
          %154 = sbr.rel (%p152) target = $region24
        $region23: #{tpu_custom_call.1} parent=15 // pred_region
          %s155 = sand.u32 %s69, 1
          %s156 = scalar_lea.sflag [#allocation6], %s155
          %s157 = sand.u32 %s69, 1
          %s158 = smul.addr %s157, 2
          %s159 = scalar_lea.vmem [#allocation5], %s158
          %s161 = ssub.s32 32, 32
          %162 = vsyncadd %s156, %s161
          %s163 = sadd.s32 %s25, %s24
          %s164 = smul.addr %s163, 32
          %s165 = scalar_lea.hbm %s1, %s164
          %s167 = sshll.u32 %s159, 4
          %s168 = int_to_ptr.vmem [resolvable:$true] %s167
          %170 = dma.hbm_to_vmem [thread:$0]  %s165, 32, %s168, %s156
        $region24: #{tpu_custom_call.1} parent=15 // pred_fallthru
          _
      $region16: #{tpu_custom_call.1} parent=5 // pred_fallthru
        _
      %p171 = scmp.le.s32.totalorder 1, %s17
      %p172 = scmp.lt.s32.totalorder %s17, 3
      %p173 = pnand %p171, %p172
      %p174 = pneg %p173
      // Predicated region
      $region25: #{tpu_custom_call.1} parent=5 // pred_check
        _
      $region26: #{tpu_custom_call.1} parent=5 // pred_check_branch
        %176 = sbr.rel (%p173) target = $region28
      $region27: #{tpu_custom_call.1} parent=5 // pred_region
        %s177 = ssub.s32 %s17, 1
        %s178 = sand.u32 %s44, 1
        %s179 = scalar_lea.sflag [#allocation3], %s178
        %s180 = sand.u32 %s44, 1
        %s181 = smul.addr %s180, 8
        %s182 = scalar_lea.vmem [#allocation2], %s181
        // Predicated region
        $region29: #{tpu_custom_call.1} parent=27 // pred_check
          %p183 = pneg %p57
        $region30: #{tpu_custom_call.1} parent=27 // pred_check_branch
          %185 = sbr.rel (%p183) target = $region32
        $region31: #{tpu_custom_call.1} parent=27 // pred_region
          %186 = dma.done %s179, 128
        $region32: #{tpu_custom_call.1} parent=27 // pred_fallthru
          _
        %s187 = sand.u32 %s72, 1
        %s188 = scalar_lea.sflag [#allocation6], %s187
        %s189 = sand.u32 %s72, 1
        %s190 = smul.addr %s189, 2
        %s191 = scalar_lea.vmem [#allocation5], %s190
        // Predicated region
        $region33: #{tpu_custom_call.1} parent=27 // pred_check
          %p192 = pneg %p85
        $region34: #{tpu_custom_call.1} parent=27 // pred_check_branch
          %194 = sbr.rel (%p192) target = $region36
        $region35: #{tpu_custom_call.1} parent=27 // pred_region
          %195 = dma.done %s188, 32
        $region36: #{tpu_custom_call.1} parent=27 // pred_fallthru
          _
        %s196 = sand.u32 %s44, 1
        %s197 = scalar_lea.sflag [#allocation3], %s196
        %s198 = sand.u32 %s44, 1
        %s199 = smul.addr %s198, 8
        %s200 = scalar_lea.vmem [#allocation2], %s199
        %p201 = pneg %p57
        %p202 = pneg %p54
        %s203 = sand.u32 %s72, 1
        %s204 = scalar_lea.sflag [#allocation6], %s203
        %s205 = sand.u32 %s72, 1
        %s206 = smul.addr %s205, 2
        %s207 = scalar_lea.vmem [#allocation5], %s206
        %p208 = pneg %p85
        %p209 = pneg %p82
        %p210 = pneg %p111
        %p211 = pneg %p108
        %s212 = sand.u32 %s98, 1
        %s213 = scalar_lea.sflag [#allocation4], %s212
        %s214 = sand.u32 %s98, 1
        %s215 = smul.addr %s214, 2
        %s216 = scalar_lea.vmem [#allocation7], %s215
        %v217 = vld [vmem:[%s182] sm:$0x3]
        %v218 = vld [vmem:[%s182 + $0x2] sm:$0x3]
        %v219 = vld [vmem:[%s182 + $0x4] sm:$0x3]
        %v220 = vld [vmem:[%s182 + $0x6] sm:$0x3]
        %v221 = vld [vmem:[%s191] sm:$0x3]
        %vm222 = vcmask 1041408
        %v223 = vsel %vm222, %v217, -inf
        %v224 = vsel %vm222, %v218, -inf
        %v225 = vsel %vm222, %v219, -inf
        %v226 = vsel %vm222, %v220, -inf
        %v227 = vmax.f32 %v223, %v224
        %v228 = vmax.f32 %v225, %v226
        %v229 = vmax.f32 %v227, %v228
        %v230 = vsub.f32 %v217, %v229
        %v231 = vsub.f32 %v218, %v229
        %v232 = vsub.f32 %v219, %v229
        %v233 = vsub.f32 %v220, %v229
        %v234 = vmul.f32 %v230, 1.442695
        %v235 = vpow.pop %v234
        %v236 = vmul.f32 %v231, 1.442695
        %v237 = vpow.pop %v236
        %v238 = vmul.f32 %v232, 1.442695
        %v239 = vpow.pop %v238
        %v240 = vmul.f32 %v233, 1.442695
        %v241 = vpow.pop %v240
        %v242 = vsel %vm222, %v235, 0.0
        %v243 = vsel %vm222, %v237, 0.0
        %v244 = vadd.f32 %v242, %v243
        %v245 = vsel %vm222, %v239, 0.0
        %v246 = vadd.f32 %v244, %v245
        %v247 = vsel %vm222, %v241, 0.0
        %v248 = vadd.f32 %v246, %v247
        %vm249 = vcmp.eq.s32.totalorder %v221, 0
        %vm250 = vcmp.eq.s32.totalorder %v221, 1
        %vm251 = vcmp.eq.s32.totalorder %v221, 2
        %vm252 = vcmp.eq.s32.totalorder %v221, 3
        %v253 = vsel %vm249, %v230, 0.0
        %v254 = vsel %vm250, %v231, 0.0
        %v255 = vsel %vm251, %v232, 0.0
        %v256 = vsel %vm252, %v233, 0.0
        %v257 = vsel %vm222, %v253, 0.0
        %v258 = vsel %vm222, %v254, 0.0
        %v259 = vadd.f32 %v257, %v258
        %v260 = vsel %vm222, %v255, 0.0
        %v261 = vadd.f32 %v259, %v260
        %v262 = vsel %vm222, %v256, 0.0
        %v263 = vadd.f32 %v261, %v262
        %v264 = vsel %vm249, %v235, 0.0
        %v265 = vsel %vm250, %v237, 0.0
        %v266 = vsel %vm251, %v239, 0.0
        %v267 = vsel %vm252, %v241, 0.0
        %v268 = vsel %vm222, %v264, 0.0
        %v269 = vsel %vm222, %v265, 0.0
        %v270 = vadd.f32 %v268, %v269
        %v271 = vsel %vm222, %v266, 0.0
        %v272 = vadd.f32 %v270, %v271
        %v273 = vsel %vm222, %v267, 0.0
        %v274 = vadd.f32 %v272, %v273
        %v275 = vlog2.pop %v248
        %v276 = vmul.f32 %v275, 0.6931472
        %v277 = vsub.f32 %v276, %v263
        %v278 = vmax.f32 %v277, 0.0
        %v279 = vrcp.pop %v248
        %v280 = vmul.f32 %v274, %v279
        %v281 = vsub.f32 1.0, %v280
        %v282 = vmax.f32 %v281, 0.0
        %v283 = vmul.f32 %v282, %v282
        %v284 = vmul.f32 %v283, 0.25
        %v285 = vmul.f32 %v284, %v278
        %p286 = scmp.eq.s32.totalorder %s27, 0
        // Predicated region
        $region37: #{tpu_custom_call.1} parent=27 // pred_check
          %p287 = pneg %p286
        $region38: #{tpu_custom_call.1} parent=27 // pred_check_branch
          %289 = sbr.rel (%p287) target = $region40
        $region39: #{tpu_custom_call.1} parent=27 // pred_region
          %290 = vst [vmem:[%s216] sm:$0x3] %v285
        $region40: #{tpu_custom_call.1} parent=27 // pred_fallthru
          _
        %p291 = scmp.ne.s32.totalorder %s27, 0
        // Predicated region
        $region41: #{tpu_custom_call.1} parent=27 // pred_check
          %p292 = pneg %p291
        $region42: #{tpu_custom_call.1} parent=27 // pred_check_branch
          %294 = sbr.rel (%p292) target = $region44
        $region43: #{tpu_custom_call.1} parent=27 // pred_region
          %v295 = vld [vmem:[%s216] sm:$0x3]
          %v296 = vadd.f32 %v295, %v285
          %297 = vst [vmem:[%s216] sm:$0x3] %v296
        $region44: #{tpu_custom_call.1} parent=27 // pred_fallthru
          _
        %s298 = sand.u32 %s98, 1
        %s299 = scalar_lea.sflag [#allocation4], %s298
        %s300 = sand.u32 %s98, 1
        %s301 = smul.addr %s300, 2
        %s302 = scalar_lea.vmem [#allocation7], %s301
        // Predicated region
        $region45: #{tpu_custom_call.1} parent=27 // pred_check
          %p303 = pneg %p108
        $region46: #{tpu_custom_call.1} parent=27 // pred_check_branch
          %305 = sbr.rel (%p303) target = $region48
        $region47: #{tpu_custom_call.1} parent=27 // pred_region
          %s307 = ssub.s32 32, 32
          %308 = vsyncadd %s299, %s307
          %s309 = smul.addr %s26, 32
          %s310 = scalar_lea.hbm %s2, %s309
          %s312 = sshll.u32 %s302, 4
          %s313 = int_to_ptr.vmem [resolvable:$true] %s312
          %315 = dma.vmem_to_hbm [thread:$0]  %s313, 32, %s310, %s299
        $region48: #{tpu_custom_call.1} parent=27 // pred_fallthru
          _
      $region28: #{tpu_custom_call.1} parent=5 // pred_fallthru
        _
      %p316 = scmp.le.s32.totalorder 2, %s17
      // Predicated region
      $region49: #{tpu_custom_call.1} parent=5 // pred_check
        %p317 = pneg %p316
      $region50: #{tpu_custom_call.1} parent=5 // pred_check_branch
        %319 = sbr.rel (%p317) target = $region52
      $region51: #{tpu_custom_call.1} parent=5 // pred_region
        %s320 = ssub.s32 %s17, 2
        // Predicated region
        $region53: #{tpu_custom_call.1} parent=51 // pred_check
          %p321 = pneg %p114
        $region54: #{tpu_custom_call.1} parent=51 // pred_check_branch
          %323 = sbr.rel (%p321) target = $region56
        $region55: #{tpu_custom_call.1} parent=51 // pred_region
          %s324 = sand.u32 %s99, 1
          %s325 = scalar_lea.sflag [#allocation4], %s324
          %s326 = sand.u32 %s99, 1
          %s327 = smul.addr %s326, 2
          %s328 = scalar_lea.vmem [#allocation7], %s327
          %329 = dma.done %s325, 32
        $region56: #{tpu_custom_call.1} parent=51 // pred_fallthru
          _
      $region52: #{tpu_custom_call.1} parent=5 // pred_fallthru
        _
    $region6: #{tpu_custom_call.1} parent=1 // loop_footer
      %s21 = sadd.s32 1, %s17
    $region7: #{tpu_custom_call.1} parent=1 // loop_footer_branch
      %16 = sbr.rel target = $region3
    $region8: #{tpu_custom_call.1} parent=1 // loop_exit
      _
    %330 = vsyncpa [#allocation3], 1
    %s331 = scalar_lea.sflag [#allocation3], 1
    %332 = vsyncpa %s331, 1
    %333 = vsyncpa [#allocation6], 1
    %s334 = scalar_lea.sflag [#allocation6], 1
    %335 = vsyncpa %s334, 1
    %336 = vsyncpa [#allocation4], 1
    %s337 = scalar_lea.sflag [#allocation4], 1
    %338 = vsyncpa %s337, 1

</llo_original>
